<compile_context>
chip_gen: v7x
topology: tpu7x:2x2x1
jax: 0.10.0
libtpu: 0.0.40
codegen_flags: <defaults>
</compile_context>

<pallas_src>
import functools
import math

import jax
import jax.numpy as jnp
from jax.experimental import pallas as pl
from jax.experimental.pallas import tpu as pltpu

LANE = 128  # lane width; every layer's in/out dim (72/32/16/8/1) fits in one


def _round_up(n, m):
    return ((n + m - 1) // m) * m


def _disc_kernel(x_ref, w_ref, b_ref, o_ref, *, p, num_layers):
    """Fused forward: 4x (matmul + bias), 3x LeakyReLU, final Sigmoid.

    x_ref: (tile_b, 128) f32   -- input padded to 128 lanes
    w_ref: (L, 128, 128) f32   -- zero-padded weight slab (in, out) per layer
    b_ref: (L, 1, 128)   f32   -- zero-padded bias slab
    o_ref: (tile_b, 128) f32   -- lane-dense output block (real result in lane 0..)
    """
    h = x_ref[...]  # (tile_b, 128), already f32

    # Hidden layers: Linear -> LeakyReLU -> Dropout(identity, eval mode)
    for layer in range(num_layers - 1):
        h = jnp.dot(h, w_ref[layer], preferred_element_type=jnp.float32)
        h = h + b_ref[layer]
        h = jnp.where(h >= 0, h, p * h)

    # Output layer: Linear -> Sigmoid
    h = jnp.dot(h, w_ref[num_layers - 1], preferred_element_type=jnp.float32)
    h = h + b_ref[num_layers - 1]
    o_ref[...] = jax.nn.sigmoid(h).astype(o_ref.dtype)


def _pack_params(params):
    """Pack per-layer (W, b) into lane-dense zero-padded slabs.

    Returns (w_slab (L,128,128) f32, b_slab (L,1,128) f32).
    """
    L = len(params)
    w_slab = jnp.zeros((L, LANE, LANE), jnp.float32)
    b_slab = jnp.zeros((L, 1, LANE), jnp.float32)
    for i, (w, b) in enumerate(params):
        k, n = w.shape
        assert k <= LANE and n <= LANE, "layer dims must fit in one 128x128 tile"
        w_slab = w_slab.at[i, :k, :n].set(w.astype(jnp.float32))
        b_slab = b_slab.at[i, 0, :n].set(jnp.reshape(b, (-1,)).astype(jnp.float32))
    return w_slab, b_slab


def discriminator_forward(x, params, p, tile_b_max=512):
    """x: (B, input_size) f32. params: list of (W, b) with W stored as (in, out)."""
    B, in_size = x.shape
    out_size = params[-1][0].shape[1]
    L = len(params)
    assert in_size <= LANE

    w_slab, b_slab = _pack_params(params)

    # Batch tiling: small batches -> single tile; large batches -> 512-row
    # tiles (pipelined, double-buffered activations; weights stay resident).
    tile_b = min(tile_b_max, _round_up(B, 8))
    B_pad = _round_up(B, tile_b)
    grid = (B_pad // tile_b,)

    # Pad input to a lane-dense (B_pad, 128) slab (zeros are inert).
    x_pad = jnp.zeros((B_pad, LANE), jnp.float32).at[:B, :in_size].set(
        x.astype(jnp.float32))

    kernel = functools.partial(_disc_kernel, p=p, num_layers=L)

    out_pad = pl.pallas_call(
        kernel,
        out_shape=jax.ShapeDtypeStruct((B_pad, LANE), jnp.float32),
        grid=grid,
        in_specs=[
            # activations: one batch tile per grid step
            pl.BlockSpec((tile_b, LANE), lambda i: (i, 0)),
            # packed weights / biases: constant block index -> VMEM-resident
            pl.BlockSpec((L, LANE, LANE), lambda i: (0, 0, 0)),
            pl.BlockSpec((L, 1, LANE), lambda i: (0, 0, 0)),
        ],
        out_specs=pl.BlockSpec((tile_b, LANE), lambda i: (i, 0)),
        compiler_params=pltpu.CompilerParams(
            dimension_semantics=("parallel",)),  # v7x: split tiles across 2 TCs
    )(x_pad, w_slab, b_slab)

    return out_pad[:B, :out_size]


def init_params(key, input_size, hidden_size, output_size):
    """Deterministic init mimicking nn.Linear (uniform +/- 1/sqrt(fan_in)).

    Weights are stored transposed: (in_features, out_features).
    Biases are stored as (1, out_features).
    """
    h0 = hidden_size
    h1 = int(math.ceil(hidden_size / 2))
    h2 = int(math.ceil(hidden_size / 4))
    dims = [(input_size, h0), (h0, h1), (h1, h2), (h2, output_size)]

    params = []
    for (fan_in, fan_out) in dims:
        key, kw, kb = jax.random.split(key, 3)
        bound = 1.0 / math.sqrt(fan_in)
        w = jax.random.uniform(kw, (fan_in, fan_out), jnp.float32,
                               minval=-bound, maxval=bound)
        b = jax.random.uniform(kb, (1, fan_out), jnp.float32,
                               minval=-bound, maxval=bound)
        params.append((w, b))
    return params


def reference_forward(x, params, p):
    """Plain-JAX reference for correctness check (eval-mode dropout)."""
    h = x
    for i, (w, b) in enumerate(params):
        h = h @ w + b
        if i < len(params) - 1:
            h = jnp.where(h >= 0, h, p * h)
        else:
            h = jax.nn.sigmoid(h)
    return h


if __name__ == "__main__":
    # Module defaults: 72-d particle representation -> binary classification.
    input_size, hidden_size, output_size = 72, 32, 1
    p, dropout = 0.2, 0.3  # dropout only matters in training mode (identity here)
    batch = 8

    key = jax.random.PRNGKey(0)
    kx, kp = jax.random.split(key)
    x = jax.random.normal(kx, (batch, input_size), jnp.float32)
    params = init_params(kp, input_size, hidden_size, output_size)

    out = discriminator_forward(x, params, p)
    out = jax.block_until_ready(out)

    ref = reference_forward(x, params, p)
    assert out.shape == (batch, output_size), out.shape
    assert jnp.allclose(out, ref, atol=1e-5, rtol=1e-5), (
        f"max abs diff {jnp.max(jnp.abs(out - ref))}")

    print("KERNEL_OK")
</pallas_src>

<mosaic_0001>
module attributes {stable_mosaic.version = 11 : i64} {
  func.func @_disc_kernel(%arg0: i32, %arg1: memref<8x128xf32, #tpu.memory_space<vmem>>, %arg2: memref<4x128x128xf32, #tpu.memory_space<vmem>>, %arg3: memref<4x1x128xf32, #tpu.memory_space<vmem>>, %arg4: memref<8x128xf32, #tpu.memory_space<vmem>>) attributes {dimension_semantics = [#tpu.dimension_semantics<parallel>], iteration_bounds = array<i64: 1>, scalar_prefetch = 0 : i64, scratch_operands = 0 : i64, tpu.core_type = #tpu.core_type<tc>, window_params = [{transform_indices = @transform_0, window_bounds = array<i64: 8, 128>}, {pipeline_mode = #tpu.pipeline_mode<synchronous>, transform_indices = @transform_1, window_bounds = array<i64: 4, 128, 128>}, {pipeline_mode = #tpu.pipeline_mode<synchronous>, transform_indices = @transform_2, window_bounds = array<i64: 4, 1, 128>}, {transform_indices = @transform_3, window_bounds = array<i64: 8, 128>}]} {
    %c0 = arith.constant 0 : index
    %c0_0 = arith.constant 0 : index
    %0 = vector.load %arg1[%c0, %c0_0] : memref<8x128xf32, #tpu.memory_space<vmem>>, vector<8x128xf32>
    %c0_1 = arith.constant 0 : index
    %c0_2 = arith.constant 0 : index
    %c0_3 = arith.constant 0 : index
    %1 = vector.load %arg2[%c0_1, %c0_2, %c0_3] : memref<4x128x128xf32, #tpu.memory_space<vmem>>, vector<1x128x128xf32>
    %2 = vector.shape_cast %1 : vector<1x128x128xf32> to vector<128x128xf32>
    %cst = arith.constant dense<0.000000e+00> : vector<8x128xf32>
    %3 = tpu.matmul %0, %2, %cst {dimension_numbers = #tpu.dot_dimension_numbers<[1], [0], [0], [1], [0, 0, 1, 1], [], []>} : vector<8x128xf32>, vector<128x128xf32>, vector<8x128xf32> -> vector<8x128xf32>
    %c0_4 = arith.constant 0 : index
    %c0_5 = arith.constant 0 : index
    %c0_6 = arith.constant 0 : index
    %4 = vector.load %arg3[%c0_4, %c0_5, %c0_6] : memref<4x1x128xf32, #tpu.memory_space<vmem>>, vector<1x1x128xf32>
    %5 = vector.shape_cast %4 : vector<1x1x128xf32> to vector<1x128xf32>
    %6 = vector.broadcast %5 : vector<1x128xf32> to vector<8x128xf32>
    %7 = arith.addf %3, %6 : vector<8x128xf32>
    %cst_7 = arith.constant 0.000000e+00 : f32
    %8 = vector.broadcast %cst_7 : f32 to vector<8x128xf32>
    %9 = arith.cmpf oge, %7, %8 : vector<8x128xf32>
    %cst_8 = arith.constant 2.000000e-01 : f32
    %10 = vector.broadcast %cst_8 : f32 to vector<8x128xf32>
    %11 = arith.mulf %10, %7 : vector<8x128xf32>
    %12 = arith.select %9, %7, %11 : vector<8x128xi1>, vector<8x128xf32>
    %c1 = arith.constant 1 : index
    %c0_9 = arith.constant 0 : index
    %c0_10 = arith.constant 0 : index
    %13 = vector.load %arg2[%c1, %c0_9, %c0_10] : memref<4x128x128xf32, #tpu.memory_space<vmem>>, vector<1x128x128xf32>
    %14 = vector.shape_cast %13 : vector<1x128x128xf32> to vector<128x128xf32>
    %cst_11 = arith.constant dense<0.000000e+00> : vector<8x128xf32>
    %15 = tpu.matmul %12, %14, %cst_11 {dimension_numbers = #tpu.dot_dimension_numbers<[1], [0], [0], [1], [0, 0, 1, 1], [], []>} : vector<8x128xf32>, vector<128x128xf32>, vector<8x128xf32> -> vector<8x128xf32>
    %c1_12 = arith.constant 1 : index
    %c0_13 = arith.constant 0 : index
    %c0_14 = arith.constant 0 : index
    %16 = vector.load %arg3[%c1_12, %c0_13, %c0_14] : memref<4x1x128xf32, #tpu.memory_space<vmem>>, vector<1x1x128xf32>
    %17 = vector.shape_cast %16 : vector<1x1x128xf32> to vector<1x128xf32>
    %18 = vector.broadcast %17 : vector<1x128xf32> to vector<8x128xf32>
    %19 = arith.addf %15, %18 : vector<8x128xf32>
    %cst_15 = arith.constant 0.000000e+00 : f32
    %20 = vector.broadcast %cst_15 : f32 to vector<8x128xf32>
    %21 = arith.cmpf oge, %19, %20 : vector<8x128xf32>
    %cst_16 = arith.constant 2.000000e-01 : f32
    %22 = vector.broadcast %cst_16 : f32 to vector<8x128xf32>
    %23 = arith.mulf %22, %19 : vector<8x128xf32>
    %24 = arith.select %21, %19, %23 : vector<8x128xi1>, vector<8x128xf32>
    %c2 = arith.constant 2 : index
    %c0_17 = arith.constant 0 : index
    %c0_18 = arith.constant 0 : index
    %25 = vector.load %arg2[%c2, %c0_17, %c0_18] : memref<4x128x128xf32, #tpu.memory_space<vmem>>, vector<1x128x128xf32>
    %26 = vector.shape_cast %25 : vector<1x128x128xf32> to vector<128x128xf32>
    %cst_19 = arith.constant dense<0.000000e+00> : vector<8x128xf32>
    %27 = tpu.matmul %24, %26, %cst_19 {dimension_numbers = #tpu.dot_dimension_numbers<[1], [0], [0], [1], [0, 0, 1, 1], [], []>} : vector<8x128xf32>, vector<128x128xf32>, vector<8x128xf32> -> vector<8x128xf32>
    %c2_20 = arith.constant 2 : index
    %c0_21 = arith.constant 0 : index
    %c0_22 = arith.constant 0 : index
    %28 = vector.load %arg3[%c2_20, %c0_21, %c0_22] : memref<4x1x128xf32, #tpu.memory_space<vmem>>, vector<1x1x128xf32>
    %29 = vector.shape_cast %28 : vector<1x1x128xf32> to vector<1x128xf32>
    %30 = vector.broadcast %29 : vector<1x128xf32> to vector<8x128xf32>
    %31 = arith.addf %27, %30 : vector<8x128xf32>
    %cst_23 = arith.constant 0.000000e+00 : f32
    %32 = vector.broadcast %cst_23 : f32 to vector<8x128xf32>
    %33 = arith.cmpf oge, %31, %32 : vector<8x128xf32>
    %cst_24 = arith.constant 2.000000e-01 : f32
    %34 = vector.broadcast %cst_24 : f32 to vector<8x128xf32>
    %35 = arith.mulf %34, %31 : vector<8x128xf32>
    %36 = arith.select %33, %31, %35 : vector<8x128xi1>, vector<8x128xf32>
    %c3 = arith.constant 3 : index
    %c0_25 = arith.constant 0 : index
    %c0_26 = arith.constant 0 : index
    %37 = vector.load %arg2[%c3, %c0_25, %c0_26] : memref<4x128x128xf32, #tpu.memory_space<vmem>>, vector<1x128x128xf32>
    %38 = vector.shape_cast %37 : vector<1x128x128xf32> to vector<128x128xf32>
    %cst_27 = arith.constant dense<0.000000e+00> : vector<8x128xf32>
    %39 = tpu.matmul %36, %38, %cst_27 {dimension_numbers = #tpu.dot_dimension_numbers<[1], [0], [0], [1], [0, 0, 1, 1], [], []>} : vector<8x128xf32>, vector<128x128xf32>, vector<8x128xf32> -> vector<8x128xf32>
    %c3_28 = arith.constant 3 : index
    %c0_29 = arith.constant 0 : index
    %c0_30 = arith.constant 0 : index
    %40 = vector.load %arg3[%c3_28, %c0_29, %c0_30] : memref<4x1x128xf32, #tpu.memory_space<vmem>>, vector<1x1x128xf32>
    %41 = vector.shape_cast %40 : vector<1x1x128xf32> to vector<1x128xf32>
    %42 = vector.broadcast %41 : vector<1x128xf32> to vector<8x128xf32>
    %43 = arith.addf %39, %42 : vector<8x128xf32>
    %44 = arith.negf %43 : vector<8x128xf32>
    %45 = math.exp %44 : vector<8x128xf32>
    %cst_31 = arith.constant 1.000000e+00 : f32
    %46 = vector.broadcast %cst_31 : f32 to vector<8x128xf32>
    %47 = arith.addf %46, %45 : vector<8x128xf32>
    %48 = arith.divf %46, %47 : vector<8x128xf32>
    %c0_32 = arith.constant 0 : index
    %c0_33 = arith.constant 0 : index
    %49 = vector.load %arg4[%c0_32, %c0_33] : memref<8x128xf32, #tpu.memory_space<vmem>>, vector<8x128xf32>
    tpu.vector_store %arg4[%c0_32, %c0_33], %48 {strides = array<i32>} : memref<8x128xf32, #tpu.memory_space<vmem>>, vector<8x128xf32>,
    return
  }
  func.func @transform_0(%arg0: i32) -> (i32, i32) {
    %c0_i32 = arith.constant 0 : i32
    %c0_i32_0 = arith.constant 0 : i32
    return %arg0, %c0_i32 : i32, i32
  }
  func.func @transform_1(%arg0: i32) -> (i32, i32, i32) {
    %c0_i32 = arith.constant 0 : i32
    %c0_i32_0 = arith.constant 0 : i32
    %c0_i32_1 = arith.constant 0 : i32
    %c0_i32_2 = arith.constant 0 : i32
    return %c0_i32, %c0_i32_0, %c0_i32_1 : i32, i32, i32
  }
  func.func @transform_2(%arg0: i32) -> (i32, i32, i32) {
    %c0_i32 = arith.constant 0 : i32
    %c0_i32_0 = arith.constant 0 : i32
    %c0_i32_1 = arith.constant 0 : i32
    %c0_i32_2 = arith.constant 0 : i32
    return %c0_i32, %c0_i32_0, %c0_i32_1 : i32, i32, i32
  }
  func.func @transform_3(%arg0: i32) -> (i32, i32) {
    %c0_i32 = arith.constant 0 : i32
    %c0_i32_0 = arith.constant 0 : i32
    return %arg0, %c0_i32 : i32, i32
  }
}

</mosaic_0001>

<llo_original>
// kernel: tpu_custom_call.1
$region0: #{tpu_custom_call.1}
  #allocation0 [shape = 'u32[]', space=smem, size = 0x4, offset = 0x4, fixed_abs, tag = 'smem constant byte address 0x4 - core index']
  #allocation1 [shape = 'u32[144,128]{1,0:T(1,128)}', space=vmem, size = 0x12000, scoped, tag = 'internal scratch']
  %s0 = inlined_call_operand.hbm [shape: f32[8,128], index: 0, kind: input, shape index: {}]
  %s1 = inlined_call_operand.hbm [shape: f32[4,128,128], index: 1, kind: input, shape index: {}]
  %s2 = inlined_call_operand.vmem [shape: f32[4,1,128], index: 2, kind: input, shape index: {}]
  %s3 = inlined_call_operand.hbm [shape: f32[8,128], index: 3, kind: output, shape index: {}]
  %s4 = sld [smem:[#allocation0]]
  $region30: #{tpu_custom_call.1} parent=0
    _
  %s6 = ssub.s32 1, %s4
  %s7 = scalar_select 0, %s6, %s4
  $region1: #{tpu_custom_call.1} parent=0
    #allocation2 [shape = 'u8[4096]{0}', space=vmem, size = 0x1000, scoped, tag = 'input window, operand 0, single buffered']
    #allocation3 [shape = 's32[1]{0}', space=sflag, size = 0x4, scoped, tag = 'scoped memory for tpu_custom_call.1']
    #allocation4 [shape = 's32[1]{0}', space=sflag, size = 0x4, scoped, tag = 'scoped memory for tpu_custom_call.1']
    #allocation5 [shape = 'u8[262144]{0}', space=vmem, size = 0x40000, scoped, tag = 'input window, operand 1, single buffered']
    #allocation6 [shape = 's32[1]{0}', space=sflag, size = 0x4, scoped, tag = 'scoped memory for tpu_custom_call.1']
    #allocation7 [shape = 'u8[4096]{0}', space=vmem, size = 0x1000, scoped, tag = 'output window, operand 0, single buffered']
    %8 = vsyncpa [#allocation3], 0
    %9 = vsyncpa [#allocation6], 0
    %10 = vsyncpa [#allocation4], 0
    // Predicated region
    $region2: #{tpu_custom_call.1} parent=1 // pred_check
      _
    $region3: #{tpu_custom_call.1} parent=1 // pred_check_branch
      %12 = sbr.rel (0) target = $region5
    $region4: #{tpu_custom_call.1} parent=1 // pred_region
      %s14 = ssub.s32 128, 128
      %15 = vsyncadd [#allocation3], %s14
      %s17 = sshll.u32 [#allocation2], 4
      %s18 = int_to_ptr.vmem [resolvable:$true] %s17
      %20 = dma.hbm_to_vmem [thread:$0]  %s0, 128, %s18, [#allocation3]
    $region5: #{tpu_custom_call.1} parent=1 // pred_fallthru
      _
    // Predicated region
    $region6: #{tpu_custom_call.1} parent=1 // pred_check
      _
    $region7: #{tpu_custom_call.1} parent=1 // pred_check_branch
      %22 = sbr.rel (0) target = $region9
    $region8: #{tpu_custom_call.1} parent=1 // pred_region
      %s24 = ssub.s32 8192, 8192
      %25 = vsyncadd [#allocation6], %s24
      %s26 = sshll.u32 [#allocation5], 4
      %s27 = int_to_ptr.vmem [resolvable:$true] %s26
      %32 = dma.hbm_to_vmem [thread:$0]  %s1, 8192, %s27, [#allocation6], 128, 128, 8
    $region9: #{tpu_custom_call.1} parent=1 // pred_fallthru
      _
    // Predicated region
    $region10: #{tpu_custom_call.1} parent=1 // pred_check
      _
    $region11: #{tpu_custom_call.1} parent=1 // pred_check_branch
      %34 = sbr.rel (0) target = $region13
    $region12: #{tpu_custom_call.1} parent=1 // pred_region
      _
    $region13: #{tpu_custom_call.1} parent=1 // pred_fallthru
      _
    // Predicated region
    $region14: #{tpu_custom_call.1} parent=1 // pred_check
      _
    $region15: #{tpu_custom_call.1} parent=1 // pred_check_branch
      %36 = sbr.rel (0) target = $region17
    $region16: #{tpu_custom_call.1} parent=1 // pred_region
      %37 = dma.done [#allocation3], 128
    $region17: #{tpu_custom_call.1} parent=1 // pred_fallthru
      _
    // Predicated region
    $region18: #{tpu_custom_call.1} parent=1 // pred_check
      _
    $region19: #{tpu_custom_call.1} parent=1 // pred_check_branch
      %39 = sbr.rel (0) target = $region21
    $region20: #{tpu_custom_call.1} parent=1 // pred_region
      %40 = dma.done [#allocation6], 8192
    $region21: #{tpu_custom_call.1} parent=1 // pred_fallthru
      _
    %v41 = vld [vmem:[#allocation2] sm:$0xff]
    %v42 = vld [vmem:[#allocation5] sm:$0xff]
    %v43 = vld [vmem:[#allocation5 + $0x8] sm:$0xff]
    %v44 = vld [vmem:[#allocation5 + $0x10] sm:$0xff]
    %v45 = vld [vmem:[#allocation5 + $0x18] sm:$0xff]
    %v46 = vld [vmem:[#allocation5 + $0x20] sm:$0xff]
    %v47 = vld [vmem:[#allocation5 + $0x28] sm:$0xff]
    %v48 = vld [vmem:[#allocation5 + $0x30] sm:$0xff]
    %v49 = vld [vmem:[#allocation5 + $0x38] sm:$0xff]
    %v50 = vld [vmem:[#allocation5 + $0x40] sm:$0xff]
    %v51 = vld [vmem:[#allocation5 + $0x48] sm:$0xff]
    %v52 = vld [vmem:[#allocation5 + $0x50] sm:$0xff]
    %v53 = vld [vmem:[#allocation5 + $0x58] sm:$0xff]
    %v54 = vld [vmem:[#allocation5 + $0x60] sm:$0xff]
    %v55 = vld [vmem:[#allocation5 + $0x68] sm:$0xff]
    %v56 = vld [vmem:[#allocation5 + $0x70] sm:$0xff]
    %v57 = vld [vmem:[#allocation5 + $0x78] sm:$0xff]
    %v58 = vld [vmem:[%s2] sm:$0x1]
    %v60 = vlaneseq
    %v61 = vshrl.u32 %v60, 7
    %v62 = vsub.s32 0, %v61
    %v63 = vrot.slane %v58, %v62
    %65 = vmatprep.subr.mxu0 0.0
    %66 = vmatpush1.msra.mxu0 %v42
    %67 = vmatprep.subr.mxu0 0.0
    %68 = vmatpush1.msra.mxu0 %v43
    %69 = vmatprep.subr.mxu0 0.0
    %70 = vmatpush1.msra.mxu0 %v44
    %71 = vmatprep.subr.mxu0 0.0
    %72 = vmatpush1.msra.mxu0 %v45
    %73 = vmatprep.subr.mxu0 0.0
    %74 = vmatpush1.msra.mxu0 %v46
    %75 = vmatprep.subr.mxu0 0.0
    %76 = vmatpush1.msra.mxu0 %v47
    %77 = vmatprep.subr.mxu0 0.0
    %78 = vmatpush1.msra.mxu0 %v48
    %79 = vmatprep.subr.mxu0 0.0
    %80 = vmatpush1.msra.mxu0 %v49
    %81 = vmatprep.subr.mxu0 0.0
    %82 = vmatpush1.msra.mxu0 %v50
    %83 = vmatprep.subr.mxu0 0.0
    %84 = vmatpush1.msra.mxu0 %v51
    %85 = vmatprep.subr.mxu0 0.0
    %86 = vmatpush1.msra.mxu0 %v52
    %87 = vmatprep.subr.mxu0 0.0
    %88 = vmatpush1.msra.mxu0 %v53
    %89 = vmatprep.subr.mxu0 0.0
    %90 = vmatpush1.msra.mxu0 %v54
    %91 = vmatprep.subr.mxu0 0.0
    %92 = vmatpush1.msra.mxu0 %v55
    %93 = vmatprep.subr.mxu0 0.0
    %94 = vmatpush1.msra.mxu0 %v56
    %95 = vmatprep.subr.mxu0 0.0
    %96 = vmatpush1.msra.mxu0 %v57
    %97 = vmatprep.subr.mxu0 0.0
    %98 = vmatpush1.msra.mxu0 0.0
    %99 = vmatprep.subr.mxu0 0.0
    %100 = vmatpush1.msra.mxu0 0.0
    %101 = vmatprep.subr.mxu0 0.0
    %102 = vmatpush1.msra.mxu0 0.0
    %103 = vmatprep.subr.mxu0 0.0
    %104 = vmatpush1.msra.mxu0 0.0
    %105 = vmatprep.subr.mxu0 0.0
    %106 = vmatpush1.msra.mxu0 0.0
    %107 = vmatprep.subr.mxu0 0.0
    %108 = vmatpush1.msra.mxu0 0.0
    %109 = vmatprep.subr.mxu0 0.0
    %110 = vmatpush1.msra.mxu0 0.0
    %111 = vmatprep.subr.mxu0 0.0
    %112 = vmatpush1.msra.mxu0 0.0
    %113 = vmatprep.subr.mxu0 0.0
    %114 = vmatpush1.msra.mxu0 0.0
    %115 = vmatprep.subr.mxu0 0.0
    %116 = vmatpush1.msra.mxu0 0.0
    %117 = vmatprep.subr.mxu0 0.0
    %118 = vmatpush1.msra.mxu0 0.0
    %119 = vmatprep.subr.mxu0 0.0
    %120 = vmatpush1.msra.mxu0 0.0
    %121 = vmatprep.subr.mxu0 0.0
    %122 = vmatpush1.msra.mxu0 0.0
    %123 = vmatprep.subr.mxu0 0.0
    %124 = vmatpush1.msra.mxu0 0.0
    %125 = vmatprep.subr.mxu0 0.0
    %126 = vmatpush1.msra.mxu0 0.0
    %127 = vmatprep.subr.mxu0 0.0
    %128 = vmatpush1.msra.mxu0 0.0
    %129 = vmatprep.mubr.f32.mxu0 0.0
    %130 = vmatmul.mubr.f32.gmra.mrb[0].mxu0 %v41
    %v131 = vpop.f32.mrb[0].mxu0
    %v132 = vadd.f32 %v63, %v131
    %v133 = vpop.f32.mrb[0].mxu0
    %134 = vdwg.mxu0
    %vm135 = vcmp.ge.f32.partialorder %v132, 0.0
    %v136 = vmul.f32 %v132, 0.2
    %v137 = vsel %vm135, %v132, %v136
    %s138 = scalar_lea.vmem [#allocation5], 128
    %v139 = vld [vmem:[%s138] sm:$0xff]
    %v140 = vld [vmem:[%s138 + $0x8] sm:$0xff]
    %v141 = vld [vmem:[%s138 + $0x10] sm:$0xff]
    %v142 = vld [vmem:[%s138 + $0x18] sm:$0xff]
    %v143 = vld [vmem:[%s138 + $0x20] sm:$0xff]
    %v144 = vld [vmem:[%s138 + $0x28] sm:$0xff]
    %v145 = vld [vmem:[%s138 + $0x30] sm:$0xff]
    %v146 = vld [vmem:[%s138 + $0x38] sm:$0xff]
    %v147 = vld [vmem:[%s138 + $0x40] sm:$0xff]
    %v148 = vld [vmem:[%s138 + $0x48] sm:$0xff]
    %v149 = vld [vmem:[%s138 + $0x50] sm:$0xff]
    %v150 = vld [vmem:[%s138 + $0x58] sm:$0xff]
    %v151 = vld [vmem:[%s138 + $0x60] sm:$0xff]
    %v152 = vld [vmem:[%s138 + $0x68] sm:$0xff]
    %v153 = vld [vmem:[%s138 + $0x70] sm:$0xff]
    %v154 = vld [vmem:[%s138 + $0x78] sm:$0xff]
    %s155 = scalar_lea.vmem %s2, 1
    %v156 = vld [vmem:[%s155] sm:$0x1]
    %v158 = vlaneseq
    %v159 = vshrl.u32 %v158, 7
    %v160 = vsub.s32 0, %v159
    %v161 = vrot.slane %v156, %v160
    %163 = vmatprep.subr.mxu0 0.0
    %164 = vmatpush1.msra.mxu0 %v139
    %165 = vmatprep.subr.mxu0 0.0
    %166 = vmatpush1.msra.mxu0 %v140
    %167 = vmatprep.subr.mxu0 0.0
    %168 = vmatpush1.msra.mxu0 %v141
    %169 = vmatprep.subr.mxu0 0.0
    %170 = vmatpush1.msra.mxu0 %v142
    %171 = vmatprep.subr.mxu0 0.0
    %172 = vmatpush1.msra.mxu0 %v143
    %173 = vmatprep.subr.mxu0 0.0
    %174 = vmatpush1.msra.mxu0 %v144
    %175 = vmatprep.subr.mxu0 0.0
    %176 = vmatpush1.msra.mxu0 %v145
    %177 = vmatprep.subr.mxu0 0.0
    %178 = vmatpush1.msra.mxu0 %v146
    %179 = vmatprep.subr.mxu0 0.0
    %180 = vmatpush1.msra.mxu0 %v147
    %181 = vmatprep.subr.mxu0 0.0
    %182 = vmatpush1.msra.mxu0 %v148
    %183 = vmatprep.subr.mxu0 0.0
    %184 = vmatpush1.msra.mxu0 %v149
    %185 = vmatprep.subr.mxu0 0.0
    %186 = vmatpush1.msra.mxu0 %v150
    %187 = vmatprep.subr.mxu0 0.0
    %188 = vmatpush1.msra.mxu0 %v151
    %189 = vmatprep.subr.mxu0 0.0
    %190 = vmatpush1.msra.mxu0 %v152
    %191 = vmatprep.subr.mxu0 0.0
    %192 = vmatpush1.msra.mxu0 %v153
    %193 = vmatprep.subr.mxu0 0.0
    %194 = vmatpush1.msra.mxu0 %v154
    %195 = vmatprep.subr.mxu0 0.0
    %196 = vmatpush1.msra.mxu0 0.0
    %197 = vmatprep.subr.mxu0 0.0
    %198 = vmatpush1.msra.mxu0 0.0
    %199 = vmatprep.subr.mxu0 0.0
    %200 = vmatpush1.msra.mxu0 0.0
    %201 = vmatprep.subr.mxu0 0.0
    %202 = vmatpush1.msra.mxu0 0.0
    %203 = vmatprep.subr.mxu0 0.0
    %204 = vmatpush1.msra.mxu0 0.0
    %205 = vmatprep.subr.mxu0 0.0
    %206 = vmatpush1.msra.mxu0 0.0
    %207 = vmatprep.subr.mxu0 0.0
    %208 = vmatpush1.msra.mxu0 0.0
    %209 = vmatprep.subr.mxu0 0.0
    %210 = vmatpush1.msra.mxu0 0.0
    %211 = vmatprep.subr.mxu0 0.0
    %212 = vmatpush1.msra.mxu0 0.0
    %213 = vmatprep.subr.mxu0 0.0
    %214 = vmatpush1.msra.mxu0 0.0
    %215 = vmatprep.subr.mxu0 0.0
    %216 = vmatpush1.msra.mxu0 0.0
    %217 = vmatprep.subr.mxu0 0.0
    %218 = vmatpush1.msra.mxu0 0.0
    %219 = vmatprep.subr.mxu0 0.0
    %220 = vmatpush1.msra.mxu0 0.0
    %221 = vmatprep.subr.mxu0 0.0
    %222 = vmatpush1.msra.mxu0 0.0
    %223 = vmatprep.subr.mxu0 0.0
    %224 = vmatpush1.msra.mxu0 0.0
    %225 = vmatprep.subr.mxu0 0.0
    %226 = vmatpush1.msra.mxu0 0.0
    %227 = vmatprep.mubr.f32.mxu0 0.0
    %228 = vmatmul.mubr.f32.gmra.mrb[0].mxu0 %v137
    %v229 = vpop.f32.mrb[0].mxu0
    %v230 = vadd.f32 %v161, %v229
    %v231 = vpop.f32.mrb[0].mxu0
    %232 = vdwg.mxu0
    %vm233 = vcmp.ge.f32.partialorder %v230, 0.0
    %v234 = vmul.f32 %v230, 0.2
    %v235 = vsel %vm233, %v230, %v234
    %s236 = scalar_lea.vmem [#allocation5], 256
    %v237 = vld [vmem:[%s236] sm:$0xff]
    %v238 = vld [vmem:[%s236 + $0x8] sm:$0xff]
    %v239 = vld [vmem:[%s236 + $0x10] sm:$0xff]
    %v240 = vld [vmem:[%s236 + $0x18] sm:$0xff]
    %v241 = vld [vmem:[%s236 + $0x20] sm:$0xff]
    %v242 = vld [vmem:[%s236 + $0x28] sm:$0xff]
    %v243 = vld [vmem:[%s236 + $0x30] sm:$0xff]
    %v244 = vld [vmem:[%s236 + $0x38] sm:$0xff]
    %v245 = vld [vmem:[%s236 + $0x40] sm:$0xff]
    %v246 = vld [vmem:[%s236 + $0x48] sm:$0xff]
    %v247 = vld [vmem:[%s236 + $0x50] sm:$0xff]
    %v248 = vld [vmem:[%s236 + $0x58] sm:$0xff]
    %v249 = vld [vmem:[%s236 + $0x60] sm:$0xff]
    %v250 = vld [vmem:[%s236 + $0x68] sm:$0xff]
    %v251 = vld [vmem:[%s236 + $0x70] sm:$0xff]
    %v252 = vld [vmem:[%s236 + $0x78] sm:$0xff]
    %s253 = scalar_lea.vmem %s2, 2
    %v254 = vld [vmem:[%s253] sm:$0x1]
    %v256 = vlaneseq
    %v257 = vshrl.u32 %v256, 7
    %v258 = vsub.s32 0, %v257
    %v259 = vrot.slane %v254, %v258
    %261 = vmatprep.subr.mxu0 0.0
    %262 = vmatpush1.msra.mxu0 %v237
    %263 = vmatprep.subr.mxu0 0.0
    %264 = vmatpush1.msra.mxu0 %v238
    %265 = vmatprep.subr.mxu0 0.0
    %266 = vmatpush1.msra.mxu0 %v239
    %267 = vmatprep.subr.mxu0 0.0
    %268 = vmatpush1.msra.mxu0 %v240
    %269 = vmatprep.subr.mxu0 0.0
    %270 = vmatpush1.msra.mxu0 %v241
    %271 = vmatprep.subr.mxu0 0.0
    %272 = vmatpush1.msra.mxu0 %v242
    %273 = vmatprep.subr.mxu0 0.0
    %274 = vmatpush1.msra.mxu0 %v243
    %275 = vmatprep.subr.mxu0 0.0
    %276 = vmatpush1.msra.mxu0 %v244
    %277 = vmatprep.subr.mxu0 0.0
    %278 = vmatpush1.msra.mxu0 %v245
    %279 = vmatprep.subr.mxu0 0.0
    %280 = vmatpush1.msra.mxu0 %v246
    %281 = vmatprep.subr.mxu0 0.0
    %282 = vmatpush1.msra.mxu0 %v247
    %283 = vmatprep.subr.mxu0 0.0
    %284 = vmatpush1.msra.mxu0 %v248
    %285 = vmatprep.subr.mxu0 0.0
    %286 = vmatpush1.msra.mxu0 %v249
    %287 = vmatprep.subr.mxu0 0.0
    %288 = vmatpush1.msra.mxu0 %v250
    %289 = vmatprep.subr.mxu0 0.0
    %290 = vmatpush1.msra.mxu0 %v251
    %291 = vmatprep.subr.mxu0 0.0
    %292 = vmatpush1.msra.mxu0 %v252
    %293 = vmatprep.subr.mxu0 0.0
    %294 = vmatpush1.msra.mxu0 0.0
    %295 = vmatprep.subr.mxu0 0.0
    %296 = vmatpush1.msra.mxu0 0.0
    %297 = vmatprep.subr.mxu0 0.0
    %298 = vmatpush1.msra.mxu0 0.0
    %299 = vmatprep.subr.mxu0 0.0
    %300 = vmatpush1.msra.mxu0 0.0
    %301 = vmatprep.subr.mxu0 0.0
    %302 = vmatpush1.msra.mxu0 0.0
    %303 = vmatprep.subr.mxu0 0.0
    %304 = vmatpush1.msra.mxu0 0.0
    %305 = vmatprep.subr.mxu0 0.0
    %306 = vmatpush1.msra.mxu0 0.0
    %307 = vmatprep.subr.mxu0 0.0
    %308 = vmatpush1.msra.mxu0 0.0
    %309 = vmatprep.subr.mxu0 0.0
    %310 = vmatpush1.msra.mxu0 0.0
    %311 = vmatprep.subr.mxu0 0.0
    %312 = vmatpush1.msra.mxu0 0.0
    %313 = vmatprep.subr.mxu0 0.0
    %314 = vmatpush1.msra.mxu0 0.0
    %315 = vmatprep.subr.mxu0 0.0
    %316 = vmatpush1.msra.mxu0 0.0
    %317 = vmatprep.subr.mxu0 0.0
    %318 = vmatpush1.msra.mxu0 0.0
    %319 = vmatprep.subr.mxu0 0.0
    %320 = vmatpush1.msra.mxu0 0.0
    %321 = vmatprep.subr.mxu0 0.0
    %322 = vmatpush1.msra.mxu0 0.0
    %323 = vmatprep.subr.mxu0 0.0
    %324 = vmatpush1.msra.mxu0 0.0
    %325 = vmatprep.mubr.f32.mxu0 0.0
    %326 = vmatmul.mubr.f32.gmra.mrb[0].mxu0 %v235
    %v327 = vpop.f32.mrb[0].mxu0
    %v328 = vadd.f32 %v259, %v327
    %v329 = vpop.f32.mrb[0].mxu0
    %330 = vdwg.mxu0
    %vm331 = vcmp.ge.f32.partialorder %v328, 0.0
    %v332 = vmul.f32 %v328, 0.2
    %v333 = vsel %vm331, %v328, %v332
    %s334 = scalar_lea.vmem [#allocation5], 384
    %v335 = vld [vmem:[%s334] sm:$0xff]
    %v336 = vld [vmem:[%s334 + $0x8] sm:$0xff]
    %v337 = vld [vmem:[%s334 + $0x10] sm:$0xff]
    %v338 = vld [vmem:[%s334 + $0x18] sm:$0xff]
    %v339 = vld [vmem:[%s334 + $0x20] sm:$0xff]
    %v340 = vld [vmem:[%s334 + $0x28] sm:$0xff]
    %v341 = vld [vmem:[%s334 + $0x30] sm:$0xff]
    %v342 = vld [vmem:[%s334 + $0x38] sm:$0xff]
    %v343 = vld [vmem:[%s334 + $0x40] sm:$0xff]
    %v344 = vld [vmem:[%s334 + $0x48] sm:$0xff]
    %v345 = vld [vmem:[%s334 + $0x50] sm:$0xff]
    %v346 = vld [vmem:[%s334 + $0x58] sm:$0xff]
    %v347 = vld [vmem:[%s334 + $0x60] sm:$0xff]
    %v348 = vld [vmem:[%s334 + $0x68] sm:$0xff]
    %v349 = vld [vmem:[%s334 + $0x70] sm:$0xff]
    %v350 = vld [vmem:[%s334 + $0x78] sm:$0xff]
    %s351 = scalar_lea.vmem %s2, 3
    %v352 = vld [vmem:[%s351] sm:$0x1]
    %v354 = vlaneseq
    %v355 = vshrl.u32 %v354, 7
    %v356 = vsub.s32 0, %v355
    %v357 = vrot.slane %v352, %v356
    %359 = vmatprep.subr.mxu0 0.0
    %360 = vmatpush1.msra.mxu0 %v335
    %361 = vmatprep.subr.mxu0 0.0
    %362 = vmatpush1.msra.mxu0 %v336
    %363 = vmatprep.subr.mxu0 0.0
    %364 = vmatpush1.msra.mxu0 %v337
    %365 = vmatprep.subr.mxu0 0.0
    %366 = vmatpush1.msra.mxu0 %v338
    %367 = vmatprep.subr.mxu0 0.0
    %368 = vmatpush1.msra.mxu0 %v339
    %369 = vmatprep.subr.mxu0 0.0
    %370 = vmatpush1.msra.mxu0 %v340
    %371 = vmatprep.subr.mxu0 0.0
    %372 = vmatpush1.msra.mxu0 %v341
    %373 = vmatprep.subr.mxu0 0.0
    %374 = vmatpush1.msra.mxu0 %v342
    %375 = vmatprep.subr.mxu0 0.0
    %376 = vmatpush1.msra.mxu0 %v343
    %377 = vmatprep.subr.mxu0 0.0
    %378 = vmatpush1.msra.mxu0 %v344
    %379 = vmatprep.subr.mxu0 0.0
    %380 = vmatpush1.msra.mxu0 %v345
    %381 = vmatprep.subr.mxu0 0.0
    %382 = vmatpush1.msra.mxu0 %v346
    %383 = vmatprep.subr.mxu0 0.0
    %384 = vmatpush1.msra.mxu0 %v347
    %385 = vmatprep.subr.mxu0 0.0
    %386 = vmatpush1.msra.mxu0 %v348
    %387 = vmatprep.subr.mxu0 0.0
    %388 = vmatpush1.msra.mxu0 %v349
    %389 = vmatprep.subr.mxu0 0.0
    %390 = vmatpush1.msra.mxu0 %v350
    %391 = vmatprep.subr.mxu0 0.0
    %392 = vmatpush1.msra.mxu0 0.0
    %393 = vmatprep.subr.mxu0 0.0
    %394 = vmatpush1.msra.mxu0 0.0
    %395 = vmatprep.subr.mxu0 0.0
    %396 = vmatpush1.msra.mxu0 0.0
    %397 = vmatprep.subr.mxu0 0.0
    %398 = vmatpush1.msra.mxu0 0.0
    %399 = vmatprep.subr.mxu0 0.0
    %400 = vmatpush1.msra.mxu0 0.0
    %401 = vmatprep.subr.mxu0 0.0
    %402 = vmatpush1.msra.mxu0 0.0
    %403 = vmatprep.subr.mxu0 0.0
    %404 = vmatpush1.msra.mxu0 0.0
    %405 = vmatprep.subr.mxu0 0.0
    %406 = vmatpush1.msra.mxu0 0.0
    %407 = vmatprep.subr.mxu0 0.0
    %408 = vmatpush1.msra.mxu0 0.0
    %409 = vmatprep.subr.mxu0 0.0
    %410 = vmatpush1.msra.mxu0 0.0
    %411 = vmatprep.subr.mxu0 0.0
    %412 = vmatpush1.msra.mxu0 0.0
    %413 = vmatprep.subr.mxu0 0.0
    %414 = vmatpush1.msra.mxu0 0.0
    %415 = vmatprep.subr.mxu0 0.0
    %416 = vmatpush1.msra.mxu0 0.0
    %417 = vmatprep.subr.mxu0 0.0
    %418 = vmatpush1.msra.mxu0 0.0
    %419 = vmatprep.subr.mxu0 0.0
    %420 = vmatpush1.msra.mxu0 0.0
    %421 = vmatprep.subr.mxu0 0.0
    %422 = vmatpush1.msra.mxu0 0.0
    %423 = vmatprep.mubr.f32.mxu0 0.0
    %424 = vmatmul.mubr.f32.gmra.mrb[0].mxu0 %v333
    %v425 = vpop.f32.mrb[0].mxu0
    %v426 = vadd.f32 %v357, %v425
    %v427 = vpop.f32.mrb[0].mxu0
    %428 = vdwg.mxu0
    %v429 = vxor.u32 %v426, 2147483648
    %v430 = vmul.f32 %v429, 1.442695
    %v431 = vpow.pop %v430
    %v432 = vadd.f32 %v431, 1.0
    %v433 = vrcp.pop %v432
    %v434 = vmul.f32 1.0, %v433
    %435 = vst [vmem:[#allocation7] sm:$0xff] %v434
    // Predicated region
    $region22: #{tpu_custom_call.1} parent=1 // pred_check
      _
    $region23: #{tpu_custom_call.1} parent=1 // pred_check_branch
      %437 = sbr.rel (0) target = $region25
    $region24: #{tpu_custom_call.1} parent=1 // pred_region
      %s439 = ssub.s32 128, 128
      %440 = vsyncadd [#allocation4], %s439
      %s442 = sshll.u32 [#allocation7], 4
      %s443 = int_to_ptr.vmem [resolvable:$true] %s442
      %445 = dma.vmem_to_hbm [thread:$0]  %s443, 128, %s3, [#allocation4]
    $region25: #{tpu_custom_call.1} parent=1 // pred_fallthru
      _
    // Predicated region
    $region26: #{tpu_custom_call.1} parent=1 // pred_check
      _
    $region27: #{tpu_custom_call.1} parent=1 // pred_check_branch
      %447 = sbr.rel (0) target = $region29
    $region28: #{tpu_custom_call.1} parent=1 // pred_region
      %448 = dma.done [#allocation4], 128
    $region29: #{tpu_custom_call.1} parent=1 // pred_fallthru
      _
    %449 = vsyncpa [#allocation3], 1
    %450 = vsyncpa [#allocation6], 1
    %451 = vsyncpa [#allocation4], 1

</llo_original>
